<compile_context>
chip_gen: v7x
topology: tpu7x:2x2x1
jax: 0.10.0
libtpu: 0.0.40
codegen_flags: <defaults>
</compile_context>

<pallas_src>
import functools

import jax
import jax.numpy as jnp
from jax.experimental import pallas as pl
from jax.experimental.pallas import tpu as pltpu

D = 128            # z_dim / hidden size of the fusion head
N_CLASSES = 3
SAMPLE_TIMES = 10
S_PAD = 16         # sample axis padded to a multiple of 8 sublanes
VOCAB = 50
SEG_VOCAB = 2
IMG_C, IMG_H, IMG_W = 4, 16, 16
IMG_FLAT = IMG_C * IMG_H * IMG_W


# ---------------------------------------------------------------------------
# Fused Pallas kernel: the module's own hot path.
#
# Row layout of the stacked [n_rows, D] work (n_rows = 2*ns_pad + b_pad):
#   rows [0            : ns_pad   )  : 'l' path  (supp = img_mu, sample from txt dist)
#   rows [ns_pad       : 2*ns_pad )  : 'v' path  (supp = txt_mu, sample from img dist)
#   rows [2*ns_pad     : n_rows   )  : final variance-weighted fusion path
# where ns_pad = b_real * S_PAD (b-major, S_PAD samples per batch element).
# ---------------------------------------------------------------------------
def _fused_head_kernel(gate_ref,                                  # SMEM (8,)
                       txt_mu_ref, txt_lv_ref, img_mu_ref, img_lv_ref,  # VMEM [b_pad, D]
                       eps_ref,                                   # VMEM [n_rows, D]
                       w_mulv_ref, b_mulv_ref,                    # [D, 2D], [1, 2D]
                       w_ib_ref, b_ib_ref, w_fc_ref, b_fc_ref,    # [D, 128], [1, 128] (padded)
                       mu_ref, lv_ref, z_ref, out_ref, cog_ref,
                       *, b_real, s_pad, n_cls):
    d = txt_mu_ref.shape[-1]
    ns_pad = b_real * s_pad

    txt_mu = txt_mu_ref[...]
    txt_lv = txt_lv_ref[...]
    img_mu = img_mu_ref[...]
    img_lv = img_lv_ref[...]
    eps = eps_ref[...]

    # Broadcast each real batch row over the (padded) sample axis, in-kernel
    # (avoids materializing a SAMPLE_TIMES-times repeated tensor through HBM).
    def bcast_rows(x):
        return jnp.concatenate(
            [jnp.broadcast_to(x[b:b + 1, :], (s_pad, d)) for b in range(b_real)], axis=0)

    txt_mu_b = bcast_rows(txt_mu)                       # [ns_pad, D]
    img_mu_b = bcast_rows(img_mu)
    txt_std_b = bcast_rows(jnp.exp(0.5 * txt_lv))
    img_std_b = bcast_rows(jnp.exp(0.5 * img_lv))

    # TODO(synk): cog_uncertainty_sample source not provided; Gaussian draws stand-in.
    l_sample = txt_mu_b + txt_std_b * eps[0:ns_pad]           # 'l' samples
    v_sample = img_mu_b + img_std_b * eps[ns_pad:2 * ns_pad]  # 'v' samples

    # --- modality weighting for the final path (exactly the reference ordering:
    #     weight = softmax(stack([img_var, txt_var]), 0); txt_w = weight[0]) ---
    txt_var = jnp.exp(txt_lv)
    img_var = jnp.exp(img_lv)
    mx = jnp.maximum(img_var, txt_var)
    e_img = jnp.exp(img_var - mx)
    e_txt = jnp.exp(txt_var - mx)
    inv = 1.0 / (e_img + e_txt)
    txt_w = e_img * inv            # weight[0]
    img_w = e_txt * inv            # weight[1]
    feature_txt = txt_mu * txt_w   # [b_pad, D]
    feature_img = img_mu * img_w

    # Stacked 2-channel features: channel 0 = supp/txt side, channel 1 = sample/img side.
    feat0 = jnp.concatenate([img_mu_b, txt_mu_b, feature_txt], axis=0)   # [n_rows, D]
    feat1 = jnp.concatenate([l_sample, v_sample, feature_img], axis=0)   # [n_rows, D]

    # --- ChannelGate('avg') stand-in ---
    # TODO(synk): ChannelGate source not provided; the reference's gate_channels=3 is
    # inconsistent with its 2-channel inputs, so a 2->1->2 MLP gate is used.
    p0 = jnp.mean(feat0, axis=-1, keepdims=True)
    p1 = jnp.mean(feat1, axis=-1, keepdims=True)
    h = jnp.maximum(p0 * gate_ref[0] + p1 * gate_ref[1] + gate_ref[2], 0.0)
    s0 = jax.nn.sigmoid(h * gate_ref[3] + gate_ref[5])
    s1 = jax.nn.sigmoid(h * gate_ref[4] + gate_ref[6])
    fusion = s0 * feat0 + s1 * feat1                                     # [n_rows, D]

    # One lane-dense [n_rows,128] @ [128,256] matmul for mu | logvar.
    mulv = jnp.dot(fusion, w_mulv_ref[...],
                   preferred_element_type=jnp.float32) + b_mulv_ref[...]
    mu_all = mulv[:, :d]
    lv_all = mulv[:, d:]

    # fc_fusion1(mu) for every row (cog paths + final path); classes padded to 128 lanes.
    out_all = jnp.dot(mu_all, w_fc_ref[...],
                      preferred_element_type=jnp.float32) + b_fc_ref[...]  # [n_rows, 128]

    # torch.var(out, dim=-1) over the n_cls real class columns (unbiased, /(n-1)).
    col = jax.lax.broadcasted_iota(jnp.int32, (1, out_all.shape[-1]), 1)
    cmask = (col < n_cls).astype(jnp.float32)
    out_cog = out_all[0:2 * ns_pad]
    mean = jnp.sum(out_cog * cmask, axis=-1, keepdims=True) * (1.0 / n_cls)
    dif = (out_cog - mean) * cmask
    cog = jnp.sum(dif * dif, axis=-1, keepdims=True) * (1.0 / (n_cls - 1))   # [2*ns_pad, 1]
    cog_ref[...] = jnp.broadcast_to(cog, cog_ref.shape)                     # lane-dense store

    # --- final path heads ---
    mu_f = mu_all[2 * ns_pad:]
    lv_f = lv_all[2 * ns_pad:]
    # reparameterise(mu, torch.exp(logvar)): std = exp(logvar), as in the reference.
    # TODO(synk): eps could be generated in-kernel via pltpu.prng_seed/stateful_normal;
    # kept as a single consolidated host-side draw for robustness.
    z_lat = mu_f + jnp.exp(lv_f) * eps[2 * ns_pad:]
    z = jnp.dot(z_lat, w_ib_ref[...],
                preferred_element_type=jnp.float32) + b_ib_ref[...]         # [b_pad, 128]

    mu_ref[...] = mu_f
    lv_ref[...] = lv_f
    z_ref[...] = z
    out_ref[...] = out_all[2 * ns_pad:]


def fused_head(params, txt_mu_p, txt_lv_p, img_mu_p, img_lv_p, eps, *, b_real, b_pad):
    ns_pad = b_real * S_PAD
    vmem = pl.BlockSpec(memory_space=pltpu.MemorySpace.VMEM)
    smem = pl.BlockSpec(memory_space=pltpu.MemorySpace.SMEM)
    kernel = functools.partial(_fused_head_kernel,
                               b_real=b_real, s_pad=S_PAD, n_cls=N_CLASSES)
    out_shapes = (
        jax.ShapeDtypeStruct((b_pad, D), jnp.float32),        # mu (final path)
        jax.ShapeDtypeStruct((b_pad, D), jnp.float32),        # logvar
        jax.ShapeDtypeStruct((b_pad, D), jnp.float32),        # z      (classes padded)
        jax.ShapeDtypeStruct((b_pad, D), jnp.float32),        # txt_img_out (padded)
        jax.ShapeDtypeStruct((2 * ns_pad, D), jnp.float32),   # cognitive variance (lane-bcast)
    )
    return pl.pallas_call(
        kernel,
        out_shape=out_shapes,
        in_specs=[smem] + [vmem] * 11,
        out_specs=(vmem,) * 5,
    )(params["gate"], txt_mu_p, txt_lv_p, img_mu_p, img_lv_p, eps,
      params["w_mulv"], params["b_mulv"],
      params["w_ib"], params["b_ib"], params["w_fc"], params["b_fc"])


def _pad_rows(x, rows):
    return jnp.pad(x, ((0, rows - x.shape[0]), (0, 0)))


# ---------------------------------------------------------------------------
# Full forward pass
# ---------------------------------------------------------------------------
def multimodal_late_fusion_forward(params, txt, mask, segment, img, key):
    B = txt.shape[0]

    # --- stand-in encoders (plain-JAX glue, one fused GEMM per modality) ---
    # TODO(synk): BertClf / ImageClf are external submodules whose source is not
    # provided; replaced with deterministic linear encoders producing (mu, logvar, logits).
    emb = params["txt_emb"][txt]                                    # [B, L, D]
    maskf = mask.astype(jnp.float32)[..., None]
    pooled = jnp.sum(emb * maskf, axis=1) / jnp.maximum(jnp.sum(maskf, axis=1), 1.0)
    pooled = pooled + jnp.mean(params["txt_seg"][segment], axis=1)  # [B, D]
    txt_all = pooled @ params["wt_all"] + params["bt_all"]          # [B, 2D+3]
    txt_mu, txt_logvar, txt_out = (txt_all[:, :D], txt_all[:, D:2 * D],
                                   txt_all[:, 2 * D:2 * D + N_CLASSES])

    img_flat = img.reshape(B, -1)                                   # NCHW -> [B, C*H*W]
    img_all = img_flat @ params["wi_all"] + params["bi_all"]        # [B, 2D+3]
    img_mu, img_logvar, img_out = (img_all[:, :D], img_all[:, D:2 * D],
                                   img_all[:, 2 * D:2 * D + N_CLASSES])

    # --- single fused Pallas kernel: cog-uncertainty paths + modality weighting
    #     + final IB head ---
    b_pad = ((B + 7) // 8) * 8
    ns_pad = B * S_PAD
    n_rows = 2 * ns_pad + b_pad
    eps = jax.random.normal(key, (n_rows, D), jnp.float32)   # one consolidated draw

    mu_p, lv_p, z_p, out_p, cog_p = fused_head(
        params,
        _pad_rows(txt_mu, b_pad), _pad_rows(txt_logvar, b_pad),
        _pad_rows(img_mu, b_pad), _pad_rows(img_logvar, b_pad),
        eps, b_real=B, b_pad=b_pad)

    cog_l = cog_p[0:ns_pad, 0].reshape(B, S_PAD)[:, :SAMPLE_TIMES].reshape(-1)
    cog_v = cog_p[ns_pad:2 * ns_pad, 0].reshape(B, S_PAD)[:, :SAMPLE_TIMES].reshape(-1)
    # TODO(synk): cog_uncertainty_normal source not provided; normalized by the modality sum.
    total = cog_l + cog_v + 1e-8
    cog_uncertainty = {"l": cog_l / total, "v": cog_v / total}

    mu = mu_p[:B]
    logvar = lv_p[:B]
    z = z_p[:B, :N_CLASSES]
    txt_img_out = out_p[:B, :N_CLASSES]

    return [txt_img_out, txt_out, img_out, txt_mu, txt_logvar,
            img_mu, img_logvar, mu, logvar, z, cog_uncertainty]


# ---------------------------------------------------------------------------
# Deterministic parameter initialization (synthetic, no checkpoint load).
# Weights are stored pre-fused / lane-padded in the layout the kernel expects.
# ---------------------------------------------------------------------------
def init_params(key):
    ks = jax.random.split(key, 20)

    def w(k, shape, scale=0.02):
        return jax.random.normal(k, shape, jnp.float32) * scale

    p = {}
    # fusion head (the module's own parameters)
    p["gate"] = w(ks[0], (8,), 0.5)                 # ChannelGate MLP (2->1->2) packed
    w_mu, b_mu = w(ks[1], (D, D)), w(ks[2], (1, D))
    w_lv, b_lv = w(ks[3], (D, D)), w(ks[4], (1, D))
    p["w_mulv"] = jnp.concatenate([w_mu, w_lv], axis=1)            # [D, 2D]
    p["b_mulv"] = jnp.concatenate([b_mu, b_lv], axis=1)            # [1, 2D]
    w_ib, b_ib = w(ks[5], (D, N_CLASSES)), w(ks[6], (1, N_CLASSES))
    w_fc, b_fc = w(ks[7], (D, N_CLASSES)), w(ks[8], (1, N_CLASSES))
    p["w_ib"] = jnp.pad(w_ib, ((0, 0), (0, D - N_CLASSES)))        # lane-dense (zero cols)
    p["b_ib"] = jnp.pad(b_ib, ((0, 0), (0, D - N_CLASSES)))
    p["w_fc"] = jnp.pad(w_fc, ((0, 0), (0, D - N_CLASSES)))
    p["b_fc"] = jnp.pad(b_fc, ((0, 0), (0, D - N_CLASSES)))
    # stand-in text encoder (fused mu|logvar|out projection)
    p["txt_emb"] = w(ks[9], (VOCAB, D))
    p["txt_seg"] = w(ks[10], (SEG_VOCAB, D))
    p["wt_all"] = jnp.concatenate(
        [w(ks[11], (D, D)), w(ks[12], (D, D)), w(ks[13], (D, N_CLASSES))], axis=1)
    p["bt_all"] = w(ks[14], (2 * D + N_CLASSES,))
    # stand-in image encoder (fused)
    p["wi_all"] = jnp.concatenate(
        [w(ks[15], (IMG_FLAT, D)), w(ks[16], (IMG_FLAT, D)),
         w(ks[17], (IMG_FLAT, N_CLASSES))], axis=1)
    p["bi_all"] = w(ks[18], (2 * D + N_CLASSES,))
    return p


if __name__ == "__main__":
    root = jax.random.PRNGKey(0)
    kp, kd, kf = jax.random.split(root, 3)
    params = init_params(kp)

    B_in, L = 2, 8
    kt, ki = jax.random.split(kd, 2)
    txt = jax.random.randint(kt, (B_in, L), 0, VOCAB, jnp.int32)
    mask = jnp.ones((B_in, L), jnp.int32)
    segment = jnp.zeros((B_in, L), jnp.int32)
    img = jax.random.normal(ki, (B_in, IMG_C, IMG_H, IMG_W), jnp.float32)  # NCHW

    fwd = jax.jit(multimodal_late_fusion_forward)
    outs = fwd(params, txt, mask, segment, img, kf)
    jax.block_until_ready(outs)
    print("KERNEL_OK")
</pallas_src>

<mosaic_0001>
module attributes {stable_mosaic.version = 11 : i64} {
  func.func @_fused_head_kernel(%arg0: memref<8xf32, #tpu.memory_space<smem>>, %arg1: memref<8x128xf32, #tpu.memory_space<vmem>>, %arg2: memref<8x128xf32, #tpu.memory_space<vmem>>, %arg3: memref<8x128xf32, #tpu.memory_space<vmem>>, %arg4: memref<8x128xf32, #tpu.memory_space<vmem>>, %arg5: memref<72x128xf32, #tpu.memory_space<vmem>>, %arg6: memref<128x256xf32, #tpu.memory_space<vmem>>, %arg7: memref<1x256xf32, #tpu.memory_space<vmem>>, %arg8: memref<128x128xf32, #tpu.memory_space<vmem>>, %arg9: memref<1x128xf32, #tpu.memory_space<vmem>>, %arg10: memref<128x128xf32, #tpu.memory_space<vmem>>, %arg11: memref<1x128xf32, #tpu.memory_space<vmem>>, %arg12: memref<8x128xf32, #tpu.memory_space<vmem>>, %arg13: memref<8x128xf32, #tpu.memory_space<vmem>>, %arg14: memref<8x128xf32, #tpu.memory_space<vmem>>, %arg15: memref<8x128xf32, #tpu.memory_space<vmem>>, %arg16: memref<64x128xf32, #tpu.memory_space<vmem>>) attributes {dimension_semantics = [], scalar_prefetch = 0 : i64, scratch_operands = 0 : i64, tpu.core_type = #tpu.core_type<tc>} {
    %c0 = arith.constant 0 : index
    %c0_0 = arith.constant 0 : index
    %0 = vector.load %arg1[%c0, %c0_0] : memref<8x128xf32, #tpu.memory_space<vmem>>, vector<8x128xf32>
    %c0_1 = arith.constant 0 : index
    %c0_2 = arith.constant 0 : index
    %1 = vector.load %arg2[%c0_1, %c0_2] : memref<8x128xf32, #tpu.memory_space<vmem>>, vector<8x128xf32>
    %c0_3 = arith.constant 0 : index
    %c0_4 = arith.constant 0 : index
    %2 = vector.load %arg3[%c0_3, %c0_4] : memref<8x128xf32, #tpu.memory_space<vmem>>, vector<8x128xf32>
    %c0_5 = arith.constant 0 : index
    %c0_6 = arith.constant 0 : index
    %3 = vector.load %arg4[%c0_5, %c0_6] : memref<8x128xf32, #tpu.memory_space<vmem>>, vector<8x128xf32>
    %c0_7 = arith.constant 0 : index
    %c0_8 = arith.constant 0 : index
    %4 = vector.load %arg5[%c0_7, %c0_8] : memref<72x128xf32, #tpu.memory_space<vmem>>, vector<72x128xf32>
    %5 = vector.extract_strided_slice %0 {offsets = [0, 0], sizes = [1, 128], strides = [1, 1]} : vector<8x128xf32> to vector<1x128xf32>
    %6 = vector.shape_cast %5 : vector<1x128xf32> to vector<1x128xf32>
    %7 = vector.broadcast %6 : vector<1x128xf32> to vector<16x128xf32>
    %8 = vector.extract_strided_slice %0 {offsets = [1, 0], sizes = [1, 128], strides = [1, 1]} : vector<8x128xf32> to vector<1x128xf32>
    %9 = vector.shape_cast %8 : vector<1x128xf32> to vector<1x128xf32>
    %10 = vector.broadcast %9 : vector<1x128xf32> to vector<16x128xf32>
    %11 = tpu.concatenate %7, %10 in 0 : vector<16x128xf32>, vector<16x128xf32> -> vector<32x128xf32>
    %12 = vector.extract_strided_slice %2 {offsets = [0, 0], sizes = [1, 128], strides = [1, 1]} : vector<8x128xf32> to vector<1x128xf32>
    %13 = vector.shape_cast %12 : vector<1x128xf32> to vector<1x128xf32>
    %14 = vector.broadcast %13 : vector<1x128xf32> to vector<16x128xf32>
    %15 = vector.extract_strided_slice %2 {offsets = [1, 0], sizes = [1, 128], strides = [1, 1]} : vector<8x128xf32> to vector<1x128xf32>
    %16 = vector.shape_cast %15 : vector<1x128xf32> to vector<1x128xf32>
    %17 = vector.broadcast %16 : vector<1x128xf32> to vector<16x128xf32>
    %18 = tpu.concatenate %14, %17 in 0 : vector<16x128xf32>, vector<16x128xf32> -> vector<32x128xf32>
    %cst = arith.constant 5.000000e-01 : f32
    %19 = vector.broadcast %cst : f32 to vector<8x128xf32>
    %20 = arith.mulf %19, %1 : vector<8x128xf32>
    %21 = math.exp %20 : vector<8x128xf32>
    %22 = vector.extract_strided_slice %21 {offsets = [0, 0], sizes = [1, 128], strides = [1, 1]} : vector<8x128xf32> to vector<1x128xf32>
    %23 = vector.shape_cast %22 : vector<1x128xf32> to vector<1x128xf32>
    %24 = vector.broadcast %23 : vector<1x128xf32> to vector<16x128xf32>
    %25 = vector.extract_strided_slice %21 {offsets = [1, 0], sizes = [1, 128], strides = [1, 1]} : vector<8x128xf32> to vector<1x128xf32>
    %26 = vector.shape_cast %25 : vector<1x128xf32> to vector<1x128xf32>
    %27 = vector.broadcast %26 : vector<1x128xf32> to vector<16x128xf32>
    %28 = tpu.concatenate %24, %27 in 0 : vector<16x128xf32>, vector<16x128xf32> -> vector<32x128xf32>
    %cst_9 = arith.constant 5.000000e-01 : f32
    %29 = vector.broadcast %cst_9 : f32 to vector<8x128xf32>
    %30 = arith.mulf %29, %3 : vector<8x128xf32>
    %31 = math.exp %30 : vector<8x128xf32>
    %32 = vector.extract_strided_slice %31 {offsets = [0, 0], sizes = [1, 128], strides = [1, 1]} : vector<8x128xf32> to vector<1x128xf32>
    %33 = vector.shape_cast %32 : vector<1x128xf32> to vector<1x128xf32>
    %34 = vector.broadcast %33 : vector<1x128xf32> to vector<16x128xf32>
    %35 = vector.extract_strided_slice %31 {offsets = [1, 0], sizes = [1, 128], strides = [1, 1]} : vector<8x128xf32> to vector<1x128xf32>
    %36 = vector.shape_cast %35 : vector<1x128xf32> to vector<1x128xf32>
    %37 = vector.broadcast %36 : vector<1x128xf32> to vector<16x128xf32>
    %38 = tpu.concatenate %34, %37 in 0 : vector<16x128xf32>, vector<16x128xf32> -> vector<32x128xf32>
    %39 = vector.extract_strided_slice %4 {offsets = [0, 0], sizes = [32, 128], strides = [1, 1]} : vector<72x128xf32> to vector<32x128xf32>
    %40 = arith.mulf %28, %39 : vector<32x128xf32>
    %41 = arith.addf %11, %40 : vector<32x128xf32>
    %42 = vector.extract_strided_slice %4 {offsets = [32, 0], sizes = [32, 128], strides = [1, 1]} : vector<72x128xf32> to vector<32x128xf32>
    %43 = arith.mulf %38, %42 : vector<32x128xf32>
    %44 = arith.addf %18, %43 : vector<32x128xf32>
    %45 = math.exp %1 : vector<8x128xf32>
    %46 = math.exp %3 : vector<8x128xf32>
    %47 = arith.maximumf %46, %45 : vector<8x128xf32>
    %48 = arith.subf %46, %47 : vector<8x128xf32>
    %49 = math.exp %48 : vector<8x128xf32>
    %50 = arith.subf %45, %47 : vector<8x128xf32>
    %51 = math.exp %50 : vector<8x128xf32>
    %52 = arith.addf %49, %51 : vector<8x128xf32>
    %cst_10 = arith.constant 1.000000e+00 : f32
    %53 = vector.broadcast %cst_10 : f32 to vector<8x128xf32>
    %54 = arith.divf %53, %52 : vector<8x128xf32>
    %55 = arith.mulf %49, %54 : vector<8x128xf32>
    %56 = arith.mulf %51, %54 : vector<8x128xf32>
    %57 = arith.mulf %0, %55 : vector<8x128xf32>
    %58 = arith.mulf %2, %56 : vector<8x128xf32>
    %59 = tpu.concatenate %18, %11, %57 in 0 : vector<32x128xf32>, vector<32x128xf32>, vector<8x128xf32> -> vector<72x128xf32>
    %60 = tpu.concatenate %41, %44, %58 in 0 : vector<32x128xf32>, vector<32x128xf32>, vector<8x128xf32> -> vector<72x128xf32>
    %cst_11 = arith.constant dense<0.000000e+00> : vector<72xf32>
    %61 = vector.multi_reduction <add>, %59, %cst_11 [1] : vector<72x128xf32> to vector<72xf32>
    %62 = vector.shape_cast %61 : vector<72xf32> to vector<72x1xf32>
    %cst_12 = arith.constant 1.280000e+02 : f32
    %63 = vector.broadcast %cst_12 : f32 to vector<72x1xf32>
    %64 = arith.divf %62, %63 : vector<72x1xf32>
    %cst_13 = arith.constant dense<0.000000e+00> : vector<72xf32>
    %65 = vector.multi_reduction <add>, %60, %cst_13 [1] : vector<72x128xf32> to vector<72xf32>
    %66 = vector.shape_cast %65 : vector<72xf32> to vector<72x1xf32>
    %cst_14 = arith.constant 1.280000e+02 : f32
    %67 = vector.broadcast %cst_14 : f32 to vector<72x1xf32>
    %68 = arith.divf %66, %67 : vector<72x1xf32>
    %c0_15 = arith.constant 0 : index
    %69 = memref.load %arg0[%c0_15] : memref<8xf32, #tpu.memory_space<smem>>
    %70 = vector.broadcast %69 : f32 to vector<72x1xf32>
    %71 = arith.mulf %64, %70 : vector<72x1xf32>
    %c1 = arith.constant 1 : index
    %72 = memref.load %arg0[%c1] : memref<8xf32, #tpu.memory_space<smem>>
    %73 = vector.broadcast %72 : f32 to vector<72x1xf32>
    %74 = arith.mulf %68, %73 : vector<72x1xf32>
    %75 = arith.addf %71, %74 : vector<72x1xf32>
    %c2 = arith.constant 2 : index
    %76 = memref.load %arg0[%c2] : memref<8xf32, #tpu.memory_space<smem>>
    %77 = vector.broadcast %76 : f32 to vector<72x1xf32>
    %78 = arith.addf %75, %77 : vector<72x1xf32>
    %cst_16 = arith.constant 0.000000e+00 : f32
    %79 = vector.broadcast %cst_16 : f32 to vector<72x1xf32>
    %80 = arith.maximumf %78, %79 : vector<72x1xf32>
    %c3 = arith.constant 3 : index
    %81 = memref.load %arg0[%c3] : memref<8xf32, #tpu.memory_space<smem>>
    %82 = vector.broadcast %81 : f32 to vector<72x1xf32>
    %83 = arith.mulf %80, %82 : vector<72x1xf32>
    %c5 = arith.constant 5 : index
    %84 = memref.load %arg0[%c5] : memref<8xf32, #tpu.memory_space<smem>>
    %85 = vector.broadcast %84 : f32 to vector<72x1xf32>
    %86 = arith.addf %83, %85 : vector<72x1xf32>
    %87 = arith.negf %86 : vector<72x1xf32>
    %88 = math.exp %87 : vector<72x1xf32>
    %cst_17 = arith.constant 1.000000e+00 : f32
    %89 = vector.broadcast %cst_17 : f32 to vector<72x1xf32>
    %90 = arith.addf %89, %88 : vector<72x1xf32>
    %91 = arith.divf %89, %90 : vector<72x1xf32>
    %c4 = arith.constant 4 : index
    %92 = memref.load %arg0[%c4] : memref<8xf32, #tpu.memory_space<smem>>
    %93 = vector.broadcast %92 : f32 to vector<72x1xf32>
    %94 = arith.mulf %80, %93 : vector<72x1xf32>
    %c6 = arith.constant 6 : index
    %95 = memref.load %arg0[%c6] : memref<8xf32, #tpu.memory_space<smem>>
    %96 = vector.broadcast %95 : f32 to vector<72x1xf32>
    %97 = arith.addf %94, %96 : vector<72x1xf32>
    %98 = arith.negf %97 : vector<72x1xf32>
    %99 = math.exp %98 : vector<72x1xf32>
    %cst_18 = arith.constant 1.000000e+00 : f32
    %100 = vector.broadcast %cst_18 : f32 to vector<72x1xf32>
    %101 = arith.addf %100, %99 : vector<72x1xf32>
    %102 = arith.divf %100, %101 : vector<72x1xf32>
    %103 = vector.broadcast %91 : vector<72x1xf32> to vector<72x128xf32>
    %104 = arith.mulf %103, %59 : vector<72x128xf32>
    %105 = vector.broadcast %102 : vector<72x1xf32> to vector<72x128xf32>
    %106 = arith.mulf %105, %60 : vector<72x128xf32>
    %107 = arith.addf %104, %106 : vector<72x128xf32>
    %c0_19 = arith.constant 0 : index
    %c0_20 = arith.constant 0 : index
    %108 = vector.load %arg6[%c0_19, %c0_20] : memref<128x256xf32, #tpu.memory_space<vmem>>, vector<128x256xf32>
    %cst_21 = arith.constant dense<0.000000e+00> : vector<72x256xf32>
    %109 = tpu.matmul %107, %108, %cst_21 {dimension_numbers = #tpu.dot_dimension_numbers<[1], [0], [0], [1], [0, 0, 1, 1], [], []>} : vector<72x128xf32>, vector<128x256xf32>, vector<72x256xf32> -> vector<72x256xf32>
    %c0_22 = arith.constant 0 : index
    %c0_23 = arith.constant 0 : index
    %110 = vector.load %arg7[%c0_22, %c0_23] : memref<1x256xf32, #tpu.memory_space<vmem>>, vector<1x256xf32>
    %111 = vector.broadcast %110 : vector<1x256xf32> to vector<72x256xf32>
    %112 = arith.addf %109, %111 : vector<72x256xf32>
    %113 = vector.extract_strided_slice %112 {offsets = [0, 0], sizes = [72, 128], strides = [1, 1]} : vector<72x256xf32> to vector<72x128xf32>
    %114 = vector.extract_strided_slice %112 {offsets = [0, 128], sizes = [72, 128], strides = [1, 1]} : vector<72x256xf32> to vector<72x128xf32>
    %c0_24 = arith.constant 0 : index
    %c0_25 = arith.constant 0 : index
    %115 = vector.load %arg10[%c0_24, %c0_25] : memref<128x128xf32, #tpu.memory_space<vmem>>, vector<128x128xf32>
    %cst_26 = arith.constant dense<0.000000e+00> : vector<72x128xf32>
    %116 = tpu.matmul %113, %115, %cst_26 {dimension_numbers = #tpu.dot_dimension_numbers<[1], [0], [0], [1], [0, 0, 1, 1], [], []>} : vector<72x128xf32>, vector<128x128xf32>, vector<72x128xf32> -> vector<72x128xf32>
    %c0_27 = arith.constant 0 : index
    %c0_28 = arith.constant 0 : index
    %117 = vector.load %arg11[%c0_27, %c0_28] : memref<1x128xf32, #tpu.memory_space<vmem>>, vector<1x128xf32>
    %118 = vector.broadcast %117 : vector<1x128xf32> to vector<72x128xf32>
    %119 = arith.addf %116, %118 : vector<72x128xf32>
    %120 = tpu.iota {dimensions = array<i32: 1>} : vector<1x128xi32>
    %c3_i32 = arith.constant 3 : i32
    %121 = vector.broadcast %c3_i32 : i32 to vector<1x128xi32>
    %122 = arith.cmpi slt, %120, %121 : vector<1x128xi32>
    %123 = arith.extui %122 : vector<1x128xi1> to vector<1x128xi32>
    %124 = arith.sitofp %123 : vector<1x128xi32> to vector<1x128xf32>
    %125 = vector.extract_strided_slice %119 {offsets = [0, 0], sizes = [64, 128], strides = [1, 1]} : vector<72x128xf32> to vector<64x128xf32>
    %126 = vector.broadcast %124 : vector<1x128xf32> to vector<64x128xf32>
    %127 = arith.mulf %125, %126 : vector<64x128xf32>
    %cst_29 = arith.constant dense<0.000000e+00> : vector<64xf32>
    %128 = vector.multi_reduction <add>, %127, %cst_29 [1] : vector<64x128xf32> to vector<64xf32>
    %129 = vector.shape_cast %128 : vector<64xf32> to vector<64x1xf32>
    %cst_30 = arith.constant 0.333333343 : f32
    %130 = vector.broadcast %cst_30 : f32 to vector<64x1xf32>
    %131 = arith.mulf %129, %130 : vector<64x1xf32>
    %132 = vector.broadcast %131 : vector<64x1xf32> to vector<64x128xf32>
    %133 = arith.subf %125, %132 : vector<64x128xf32>
    %134 = vector.broadcast %124 : vector<1x128xf32> to vector<64x128xf32>
    %135 = arith.mulf %133, %134 : vector<64x128xf32>
    %136 = arith.mulf %135, %135 : vector<64x128xf32>
    %cst_31 = arith.constant dense<0.000000e+00> : vector<64xf32>
    %137 = vector.multi_reduction <add>, %136, %cst_31 [1] : vector<64x128xf32> to vector<64xf32>
    %138 = vector.shape_cast %137 : vector<64xf32> to vector<64x1xf32>
    %cst_32 = arith.constant 5.000000e-01 : f32
    %139 = vector.broadcast %cst_32 : f32 to vector<64x1xf32>
    %140 = arith.mulf %138, %139 : vector<64x1xf32>
    %141 = vector.shape_cast %140 : vector<64x1xf32> to vector<64x1xf32>
    %142 = vector.broadcast %141 : vector<64x1xf32> to vector<64x128xf32>
    %c0_33 = arith.constant 0 : index
    %c0_34 = arith.constant 0 : index
    %143 = vector.load %arg16[%c0_33, %c0_34] : memref<64x128xf32, #tpu.memory_space<vmem>>, vector<64x128xf32>
    tpu.vector_store %arg16[%c0_33, %c0_34], %142 {strides = array<i32>} : memref<64x128xf32, #tpu.memory_space<vmem>>, vector<64x128xf32>,
    %144 = vector.extract_strided_slice %113 {offsets = [64, 0], sizes = [8, 128], strides = [1, 1]} : vector<72x128xf32> to vector<8x128xf32>
    %145 = vector.extract_strided_slice %114 {offsets = [64, 0], sizes = [8, 128], strides = [1, 1]} : vector<72x128xf32> to vector<8x128xf32>
    %146 = math.exp %145 : vector<8x128xf32>
    %147 = vector.extract_strided_slice %4 {offsets = [64, 0], sizes = [8, 128], strides = [1, 1]} : vector<72x128xf32> to vector<8x128xf32>
    %148 = arith.mulf %146, %147 : vector<8x128xf32>
    %149 = arith.addf %144, %148 : vector<8x128xf32>
    %c0_35 = arith.constant 0 : index
    %c0_36 = arith.constant 0 : index
    %150 = vector.load %arg8[%c0_35, %c0_36] : memref<128x128xf32, #tpu.memory_space<vmem>>, vector<128x128xf32>
    %cst_37 = arith.constant dense<0.000000e+00> : vector<8x128xf32>
    %151 = tpu.matmul %149, %150, %cst_37 {dimension_numbers = #tpu.dot_dimension_numbers<[1], [0], [0], [1], [0, 0, 1, 1], [], []>} : vector<8x128xf32>, vector<128x128xf32>, vector<8x128xf32> -> vector<8x128xf32>
    %c0_38 = arith.constant 0 : index
    %c0_39 = arith.constant 0 : index
    %152 = vector.load %arg9[%c0_38, %c0_39] : memref<1x128xf32, #tpu.memory_space<vmem>>, vector<1x128xf32>
    %153 = vector.broadcast %152 : vector<1x128xf32> to vector<8x128xf32>
    %154 = arith.addf %151, %153 : vector<8x128xf32>
    %c0_40 = arith.constant 0 : index
    %c0_41 = arith.constant 0 : index
    %155 = vector.load %arg12[%c0_40, %c0_41] : memref<8x128xf32, #tpu.memory_space<vmem>>, vector<8x128xf32>
    tpu.vector_store %arg12[%c0_40, %c0_41], %144 {strides = array<i32>} : memref<8x128xf32, #tpu.memory_space<vmem>>, vector<8x128xf32>,
    %c0_42 = arith.constant 0 : index
    %c0_43 = arith.constant 0 : index
    %156 = vector.load %arg13[%c0_42, %c0_43] : memref<8x128xf32, #tpu.memory_space<vmem>>, vector<8x128xf32>
    tpu.vector_store %arg13[%c0_42, %c0_43], %145 {strides = array<i32>} : memref<8x128xf32, #tpu.memory_space<vmem>>, vector<8x128xf32>,
    %c0_44 = arith.constant 0 : index
    %c0_45 = arith.constant 0 : index
    %157 = vector.load %arg14[%c0_44, %c0_45] : memref<8x128xf32, #tpu.memory_space<vmem>>, vector<8x128xf32>
    tpu.vector_store %arg14[%c0_44, %c0_45], %154 {strides = array<i32>} : memref<8x128xf32, #tpu.memory_space<vmem>>, vector<8x128xf32>,
    %158 = vector.extract_strided_slice %119 {offsets = [64, 0], sizes = [8, 128], strides = [1, 1]} : vector<72x128xf32> to vector<8x128xf32>
    %c0_46 = arith.constant 0 : index
    %c0_47 = arith.constant 0 : index
    %159 = vector.load %arg15[%c0_46, %c0_47] : memref<8x128xf32, #tpu.memory_space<vmem>>, vector<8x128xf32>
    tpu.vector_store %arg15[%c0_46, %c0_47], %158 {strides = array<i32>} : memref<8x128xf32, #tpu.memory_space<vmem>>, vector<8x128xf32>,
    return
  }
}

</mosaic_0001>

<llo_original>
// kernel: squeeze.7
$region0: #{squeeze.7}
  %s0 = inlined_call_operand.vmem [shape: f32[32], index: 0, kind: input, shape index: {}]
  %s1 = inlined_call_operand.vmem [shape: f32[2,16], index: 1, kind: output, shape index: {}]
  $region1: #{squeeze.7} parent=0
    #allocation0 [shape = 'u8[4096]{0}', space=vmem, size = 0x1000, scoped, tag = 'scoped mem for output reshape']
    #allocation1 [shape = 'u8[4096]{0}', space=vmem, size = 0x1000, scoped, tag = 'scoped mem for input reshape']
    %s3 = sshllo.u32 0, 1
    %v4 = vld [vmem:[%s0] sm:%s3]
    %5 = vst [vmem:[#allocation1] sm:%s3] %v4
    %v6 = vld [vmem:[#allocation1] sm:$0x1]
    %vm7 = vcmask 130048
    %8 = vst.msk [vmem:[#allocation0] sm:$0x1] %vm7, %v6
    %v9 = vld [vmem:[#allocation1] sm:$0x1]
    %10 = vrot.lane.b32.xlu0 %v9, 112
    %v11 = vpop.permute.xlu0 %10
    %vm12 = vcmask 130048
    %s13 = scalar_lea.vmem [#allocation0], 1
    %14 = vst.msk [vmem:[%s13] sm:$0x1] %vm12, %v11
    %s16 = sshllo.u32 0, 2
    %v18 = vld [vmem:[#allocation0] sm:%s16]
    %s19 = sshllo.u32 0, 2
    %20 = vst [vmem:[%s1] sm:%s19] %v18

</llo_original>
